<compile_context>
chip_gen: v7x
topology: tpu7x:2x2x1
jax: 0.10.0
libtpu: 0.0.40
codegen_flags: <defaults>
</compile_context>

<pallas_src>
import functools
import math

import jax
import jax.numpy as jnp
from jax import lax
from jax.experimental import pallas as pl
from jax.experimental.pallas import tpu as pltpu

LANES = 128
BASE_SUBLANES = 8              # f32 sublane packing; bf16 -> 16, int8/fp8 -> 32
TARGET_BLOCK_BYTES = 1 << 20   # ~1 MiB per input per grid step (sweep 1-4 MiB)
ACC_ROWS_MAX = 64              # widened VMEM accumulator (64,128) f32 = 32 KiB
NUM_SHARDS = 2                 # TensorCores per chip on v7x; harmless elsewhere


def _sublane_multiple(dtype) -> int:
    """Row granularity for a dtype so tiles keep native packed layout."""
    itemsize = jnp.dtype(dtype).itemsize
    return BASE_SUBLANES * max(1, 4 // itemsize)


def _rmse_sse_kernel(sim_ref, obs_ref, out_ref, acc_ref, *,
                     tile_rows, total_rows, blocks_per_shard, acc_rows,
                     need_mask):
    """Per-shard sum of squared differences over a (rows, 128) stream."""
    i = pl.program_id(1)  # inner (sequential reduction) step within this shard

    @pl.when(i == 0)
    def _init():
        acc_ref[...] = jnp.zeros_like(acc_ref)

    d = sim_ref[...].astype(jnp.float32) - obs_ref[...].astype(jnp.float32)
    d2 = d * d

    def fold(x):
        # (tile_rows, 128) -> (acc_rows, 128): a few independent VPU add chains.
        return jnp.sum(x.reshape(tile_rows // acc_rows, acc_rows, LANES), axis=0)

    if need_mask:
        c = pl.program_id(0)
        block_start = (c * blocks_per_shard + i) * tile_rows
        overhangs = block_start + tile_rows > total_rows

        @pl.when(jnp.logical_not(overhangs))
        def _clean():
            acc_ref[...] += fold(d2)

        @pl.when(overhangs)
        def _masked():
            # Rows past total_rows hold unspecified data; zero them via select
            # (do NOT turn this into d2 * mask — that would propagate NaN/Inf).
            row = block_start + lax.broadcasted_iota(
                jnp.int32, (tile_rows, LANES), 0)
            acc_ref[...] += fold(jnp.where(row < total_rows, d2, 0.0))
    else:
        acc_ref[...] += fold(d2)

    @pl.when(i == pl.num_programs(1) - 1)
    def _finalize():
        # Single cross-lane/sublane reduce per shard; sqrt/mean happen outside.
        out_ref[0, 0] = jnp.sum(acc_ref[...])


def rmse_loss(sim: jax.Array, obs: jax.Array) -> jax.Array:
    """Pallas TPU equivalent of RMSELoss.forward(sim, obs)."""
    assert sim.shape == obs.shape, "sim and obs must have identical shapes"
    n_elems = sim.size
    out_dtype = jnp.result_type(sim.dtype, obs.dtype)

    sim_flat = sim.reshape(-1)
    obs_flat = obs.reshape(-1)

    # Dtype-aware tile granularity (packed sublanes) and byte-targeted tile size.
    row_mult = max(_sublane_multiple(sim.dtype), _sublane_multiple(obs.dtype))
    chunk = row_mult * LANES
    max_itemsize = max(jnp.dtype(sim.dtype).itemsize,
                       jnp.dtype(obs.dtype).itemsize)
    max_tile_rows = max(
        row_mult,
        (TARGET_BLOCK_BYTES // (LANES * max_itemsize)) // row_mult * row_mult)

    # Lane-aligned prefix goes through the kernel; the short tail is reduced in
    # plain JAX (avoids the full-array jnp.pad copy on a bandwidth-bound stream).
    n_main = (n_elems // chunk) * chunk
    tail = n_elems - n_main

    if n_main > 0:
        total_rows = n_main // LANES                 # multiple of row_mult
        tile_rows = min(max_tile_rows, total_rows)
        num_blocks = pl.cdiv(total_rows, tile_rows)
        num_shards = NUM_SHARDS if num_blocks >= NUM_SHARDS else 1
        blocks_per_shard = pl.cdiv(num_blocks, num_shards)
        acc_rows = math.gcd(tile_rows, ACC_ROWS_MAX)
        # Any block overhang (ragged last block or a shard's padding block)?
        need_mask = (num_shards * blocks_per_shard * tile_rows) != total_rows

        sim2d = sim_flat[:n_main].reshape(total_rows, LANES)
        obs2d = obs_flat[:n_main].reshape(total_rows, LANES)

        def block_map(c, i):
            # Clamp so a shard's padding block maps to a valid window; the
            # in-kernel mask zeroes its (logically out-of-range) contribution.
            return (jnp.minimum(c * blocks_per_shard + i, num_blocks - 1), 0)

        kernel = functools.partial(
            _rmse_sse_kernel,
            tile_rows=tile_rows,
            total_rows=total_rows,
            blocks_per_shard=blocks_per_shard,
            acc_rows=acc_rows,
            need_mask=need_mask,
        )

        partials = pl.pallas_call(
            kernel,
            out_shape=jax.ShapeDtypeStruct((num_shards, 1), jnp.float32),
            grid_spec=pltpu.PrefetchScalarGridSpec(
                num_scalar_prefetch=0,
                grid=(num_shards, blocks_per_shard),
                in_specs=[
                    pl.BlockSpec((tile_rows, LANES), block_map),
                    pl.BlockSpec((tile_rows, LANES), block_map),
                ],
                out_specs=pl.BlockSpec(
                    (1, 1), lambda c, i: (c, 0), memory_space=pltpu.SMEM),
                scratch_shapes=[pltpu.VMEM((acc_rows, LANES), jnp.float32)],
            ),
            compiler_params=pltpu.CompilerParams(
                # Outer axis splits across TensorCores (~2x on v7x); inner axis
                # is the sequential reduction.
                dimension_semantics=("parallel", "arbitrary"),
            ),
        )(sim2d, obs2d)
        sse = jnp.sum(partials)
    else:
        # Fewer elements than one aligned chunk: everything lands in the tail.
        sse = jnp.float32(0.0)

    if tail > 0:
        dt = (sim_flat[n_main:].astype(jnp.float32)
              - obs_flat[n_main:].astype(jnp.float32))
        sse = sse + jnp.sum(dt * dt)

    # Note: f32 divisor is inexact for n > 2^24; acceptable for a loss value.
    return jnp.sqrt(sse / n_elems).astype(out_dtype)


if __name__ == "__main__":
    key = jax.random.PRNGKey(0)
    k_sim, k_obs = jax.random.split(key)

    # 1) aligned element count (2*4*16*16 = 2048, multiple of 1024)
    shape = (2, 4, 16, 16)
    sim = jax.random.normal(k_sim, shape, dtype=jnp.float32)
    obs = jax.random.normal(k_obs, shape, dtype=jnp.float32)
    result = jax.block_until_ready(rmse_loss(sim, obs))
    ref = jnp.sqrt(jnp.mean((sim - obs) ** 2))
    assert jnp.allclose(result, ref, rtol=1e-5, atol=1e-6), (result, ref)

    # 2) ragged element count -> exercises the plain-JAX tail path (no pad copy)
    shape2 = (3, 1000)
    sim2 = jax.random.normal(k_sim, shape2, dtype=jnp.float32)
    obs2 = jax.random.normal(k_obs, shape2, dtype=jnp.float32)
    result2 = jax.block_until_ready(rmse_loss(sim2, obs2))
    ref2 = jnp.sqrt(jnp.mean((sim2 - obs2) ** 2))
    assert jnp.allclose(result2, ref2, rtol=1e-5, atol=1e-6), (result2, ref2)

    # 3) multi-block + 2-shard split + ragged last block + padding block + tail
    shape3 = (520, 1025)
    sim3 = jax.random.normal(k_sim, shape3, dtype=jnp.float32)
    obs3 = jax.random.normal(k_obs, shape3, dtype=jnp.float32)
    result3 = jax.block_until_ready(rmse_loss(sim3, obs3))
    ref3 = jnp.sqrt(jnp.mean((sim3 - obs3) ** 2))
    assert jnp.allclose(result3, ref3, rtol=1e-4, atol=1e-5), (result3, ref3)

    # 4) bf16 inputs -> dtype-aware (16,128) tiling, f32 accumulation in-kernel
    sim4 = sim.astype(jnp.bfloat16)
    obs4 = obs.astype(jnp.bfloat16)
    result4 = jax.block_until_ready(rmse_loss(sim4, obs4))
    ref4 = jnp.sqrt(jnp.mean(
        (sim4.astype(jnp.float32) - obs4.astype(jnp.float32)) ** 2))
    assert jnp.allclose(result4.astype(jnp.float32), ref4,
                        rtol=2e-2, atol=2e-2), (result4, ref4)

    print("KERNEL_OK")
</pallas_src>

<mosaic_0001>
module attributes {stable_mosaic.version = 11 : i64} {
  func.func @_rmse_sse_kernel(%arg0: i32, %arg1: i32, %arg2: memref<16x128xf32, #tpu.memory_space<vmem>>, %arg3: memref<16x128xf32, #tpu.memory_space<vmem>>, %arg4: memref<1x1xf32, #tpu.memory_space<smem>>, %arg5: memref<16x128xf32, #tpu.memory_space<vmem>>) attributes {dimension_semantics = [#tpu.dimension_semantics<parallel>, #tpu.dimension_semantics<arbitrary>], iteration_bounds = array<i64: 1, 1>, scalar_prefetch = 0 : i64, scratch_operands = 1 : i64, tpu.core_type = #tpu.core_type<tc>, window_params = [{transform_indices = @transform_0, window_bounds = array<i64: 16, 128>}, {transform_indices = @transform_1, window_bounds = array<i64: 16, 128>}, {transform_indices = @transform_2, window_bounds = array<i64: 1, 1>}]} {
    %c0_i32 = arith.constant 0 : i32
    %0 = arith.cmpi eq, %arg1, %c0_i32 : i32
    %1 = arith.extui %0 : i1 to i32
    %c0_i32_0 = arith.constant 0 : i32
    %2 = arith.cmpi ne, %1, %c0_i32_0 : i32
    scf.if %2 {
      %cst_10 = arith.constant 0.000000e+00 : f32
      %15 = vector.broadcast %cst_10 : f32 to vector<16x128xf32>
      %c0_11 = arith.constant 0 : index
      %c0_12 = arith.constant 0 : index
      %16 = vector.load %arg5[%c0_11, %c0_12] : memref<16x128xf32, #tpu.memory_space<vmem>>, vector<16x128xf32>
      tpu.vector_store %arg5[%c0_11, %c0_12], %15 {strides = array<i32>} : memref<16x128xf32, #tpu.memory_space<vmem>>, vector<16x128xf32>,
    } else {
    }
    %c0 = arith.constant 0 : index
    %c0_1 = arith.constant 0 : index
    %3 = vector.load %arg2[%c0, %c0_1] : memref<16x128xf32, #tpu.memory_space<vmem>>, vector<16x128xf32>
    %c0_2 = arith.constant 0 : index
    %c0_3 = arith.constant 0 : index
    %4 = vector.load %arg3[%c0_2, %c0_3] : memref<16x128xf32, #tpu.memory_space<vmem>>, vector<16x128xf32>
    %5 = arith.subf %3, %4 : vector<16x128xf32>
    %6 = arith.mulf %5, %5 : vector<16x128xf32>
    %c0_4 = arith.constant 0 : index
    %c0_5 = arith.constant 0 : index
    %7 = vector.load %arg5[%c0_4, %c0_5] : memref<16x128xf32, #tpu.memory_space<vmem>>, vector<16x128xf32>
    %8 = vector.shape_cast %6 : vector<16x128xf32> to vector<1x16x128xf32>
    %cst = arith.constant dense<0.000000e+00> : vector<16x128xf32>
    %9 = vector.multi_reduction <add>, %8, %cst [0] : vector<1x16x128xf32> to vector<16x128xf32>
    %10 = arith.addf %7, %9 : vector<16x128xf32>
    %c0_6 = arith.constant 0 : index
    %c0_7 = arith.constant 0 : index
    %11 = vector.load %arg5[%c0_6, %c0_7] : memref<16x128xf32, #tpu.memory_space<vmem>>, vector<16x128xf32>
    tpu.vector_store %arg5[%c0_6, %c0_7], %10 {strides = array<i32>} : memref<16x128xf32, #tpu.memory_space<vmem>>, vector<16x128xf32>,
    %c0_i32_8 = arith.constant 0 : i32
    %12 = arith.cmpi eq, %arg1, %c0_i32_8 : i32
    %13 = arith.extui %12 : i1 to i32
    %c0_i32_9 = arith.constant 0 : i32
    %14 = arith.cmpi ne, %13, %c0_i32_9 : i32
    scf.if %14 {
      %c0_10 = arith.constant 0 : index
      %c0_11 = arith.constant 0 : index
      %15 = vector.load %arg5[%c0_10, %c0_11] : memref<16x128xf32, #tpu.memory_space<vmem>>, vector<16x128xf32>
      %16 = vector.shape_cast %15 : vector<16x128xf32> to vector<1x16x128xf32>
      %cst_12 = arith.constant dense<0.000000e+00> : vector<1xf32>
      %17 = vector.multi_reduction <add>, %16, %cst_12 [1, 2] : vector<1x16x128xf32> to vector<1xf32>
      %18 = vector.shape_cast %17 : vector<1xf32> to vector<1x1x1xf32>
      %19 = vector.extract %18[0, 0, 0] : f32 from vector<1x1x1xf32>
      %c0_13 = arith.constant 0 : index
      %c0_14 = arith.constant 0 : index
      %20 = memref.load %arg4[%c0_13, %c0_14] : memref<1x1xf32, #tpu.memory_space<smem>>
      memref.store %19, %arg4[%c0_13, %c0_14] : memref<1x1xf32, #tpu.memory_space<smem>>
    } else {
    }
    return
  }
  func.func @transform_0(%arg0: i32, %arg1: i32) -> (i32, i32) {
    %c1_i32 = arith.constant 1 : i32
    %0 = arith.muli %arg0, %c1_i32 : i32
    %1 = arith.addi %0, %arg1 : i32
    %c0_i32 = arith.constant 0 : i32
    %2 = arith.minsi %1, %c0_i32 : i32
    %c0_i32_0 = arith.constant 0 : i32
    %c0_i32_1 = arith.constant 0 : i32
    return %2, %c0_i32_0 : i32, i32
  }
  func.func @transform_1(%arg0: i32, %arg1: i32) -> (i32, i32) {
    %c1_i32 = arith.constant 1 : i32
    %0 = arith.muli %arg0, %c1_i32 : i32
    %1 = arith.addi %0, %arg1 : i32
    %c0_i32 = arith.constant 0 : i32
    %2 = arith.minsi %1, %c0_i32 : i32
    %c0_i32_0 = arith.constant 0 : i32
    %c0_i32_1 = arith.constant 0 : i32
    return %2, %c0_i32_0 : i32, i32
  }
  func.func @transform_2(%arg0: i32, %arg1: i32) -> (i32, i32) {
    %c0_i32 = arith.constant 0 : i32
    %c0_i32_0 = arith.constant 0 : i32
    return %arg0, %c0_i32 : i32, i32
  }
}

</mosaic_0001>

<llo_original>
// kernel: tpu_custom_call.1
$region0: #{tpu_custom_call.1}
  #allocation0 [shape = 'u32[]', space=smem, size = 0x4, offset = 0x4, fixed_abs, tag = 'smem constant byte address 0x4 - core index']
  #allocation1 [shape = 'u32[144,128]{1,0:T(1,128)}', space=vmem, size = 0x12000, scoped, tag = 'internal scratch']
  #allocation2 [shape = 'f32[16,128]{1,0:T(8,128)}', space=vmem, size = 0x2000, scoped, tag = 'scratch operand']
  %s0 = inlined_call_operand.hbm [shape: f32[16,128], index: 0, kind: input, shape index: {}]
  %s1 = inlined_call_operand.hbm [shape: f32[16,128], index: 1, kind: input, shape index: {}]
  %s2 = inlined_call_operand.hbm [shape: f32[1,1], index: 2, kind: output, shape index: {}]
  %s3 = sld [smem:[#allocation0]]
  $region34: #{tpu_custom_call.1} parent=0
    _
  %s5 = ssub.s32 1, %s3
  %s6 = scalar_select 0, %s5, %s3
  $region1: #{tpu_custom_call.1} parent=0
    #allocation3 [shape = 'u8[8192]{0}', space=vmem, size = 0x2000, scoped, tag = 'input window, operand 0, single buffered']
    #allocation4 [shape = 's32[1]{0}', space=sflag, size = 0x4, scoped, tag = 'scoped memory for tpu_custom_call.1']
    #allocation5 [shape = 's32[1]{0}', space=sflag, size = 0x4, scoped, tag = 'scoped memory for tpu_custom_call.1']
    #allocation6 [shape = 'u8[8192]{0}', space=vmem, size = 0x2000, scoped, tag = 'input window, operand 1, single buffered']
    #allocation7 [shape = 's32[1]{0}', space=sflag, size = 0x4, scoped, tag = 'scoped memory for tpu_custom_call.1']
    #allocation8 [shape = 'u8[512]{0}', space=smem, size = 0x200, scoped, tag = 'output window, operand 0, single buffered']
    %7 = vsyncpa [#allocation4], 0
    %8 = vsyncpa [#allocation7], 0
    %9 = vsyncpa [#allocation5], 0
    // Predicated region
    $region2: #{tpu_custom_call.1} parent=1 // pred_check
      _
    $region3: #{tpu_custom_call.1} parent=1 // pred_check_branch
      %11 = sbr.rel (0) target = $region5
    $region4: #{tpu_custom_call.1} parent=1 // pred_region
      %s12 = sadd.s32 0, 0
      %p13 = scmp.lt.s32.totalorder %s12, 0
      %s14 = scalar_select %p13, %s12, 0
      %s15 = smul.u32 2, %s14
      %s17 = ssub.s32 256, 256
      %18 = vsyncadd [#allocation4], %s17
      %s19 = smul.addr %s15, 128
      %s20 = scalar_lea.hbm %s0, %s19
      %s21 = sshll.u32 [#allocation3], 4
      %s22 = int_to_ptr.vmem [resolvable:$true] %s21
      %27 = dma.hbm_to_vmem [thread:$0]  %s20, 256, %s22, [#allocation4], 128, 128, 8
    $region5: #{tpu_custom_call.1} parent=1 // pred_fallthru
      _
    // Predicated region
    $region6: #{tpu_custom_call.1} parent=1 // pred_check
      _
    $region7: #{tpu_custom_call.1} parent=1 // pred_check_branch
      %29 = sbr.rel (0) target = $region9
    $region8: #{tpu_custom_call.1} parent=1 // pred_region
      %s30 = sadd.s32 0, 0
      %p31 = scmp.lt.s32.totalorder %s30, 0
      %s32 = scalar_select %p31, %s30, 0
      %s33 = smul.u32 2, %s32
      %s35 = ssub.s32 256, 256
      %36 = vsyncadd [#allocation7], %s35
      %s37 = smul.addr %s33, 128
      %s38 = scalar_lea.hbm %s1, %s37
      %s39 = sshll.u32 [#allocation6], 4
      %s40 = int_to_ptr.vmem [resolvable:$true] %s39
      %45 = dma.hbm_to_vmem [thread:$0]  %s38, 256, %s40, [#allocation7], 128, 128, 8
    $region9: #{tpu_custom_call.1} parent=1 // pred_fallthru
      _
    // Predicated region
    $region10: #{tpu_custom_call.1} parent=1 // pred_check
      _
    $region11: #{tpu_custom_call.1} parent=1 // pred_check_branch
      %47 = sbr.rel (0) target = $region13
    $region12: #{tpu_custom_call.1} parent=1 // pred_region
      %48 = dma.done [#allocation4], 256
    $region13: #{tpu_custom_call.1} parent=1 // pred_fallthru
      _
    // Predicated region
    $region14: #{tpu_custom_call.1} parent=1 // pred_check
      _
    $region15: #{tpu_custom_call.1} parent=1 // pred_check_branch
      %50 = sbr.rel (0) target = $region17
    $region16: #{tpu_custom_call.1} parent=1 // pred_region
      %51 = dma.done [#allocation7], 256
    $region17: #{tpu_custom_call.1} parent=1 // pred_fallthru
      _
    %s52 = sadd.s32 0, 0
    %p53 = scmp.lt.s32.totalorder %s52, 0
    %s54 = scalar_select %p53, %s52, 0
    %s55 = smul.u32 2, %s54
    %s56 = sadd.s32 0, 0
    %p57 = scmp.lt.s32.totalorder %s56, 0
    %s58 = scalar_select %p57, %s56, 0
    %s59 = smul.u32 2, %s58
    %p60 = scmp.eq.s32.totalorder 0, 0
    // Predicated region
    $region18: #{tpu_custom_call.1} parent=1 // pred_check
      %p61 = pneg %p60
    $region19: #{tpu_custom_call.1} parent=1 // pred_check_branch
      %63 = sbr.rel (%p61) target = $region21
    $region20: #{tpu_custom_call.1} parent=1 // pred_region
      %64 = vst [vmem:[#allocation2] sm:$0xff] 0.0
      %65 = vst [vmem:[#allocation2 + $0x8] sm:$0xff] 0.0
    $region21: #{tpu_custom_call.1} parent=1 // pred_fallthru
      _
    %v66 = vld [vmem:[#allocation3] sm:$0xff]
    %v67 = vld [vmem:[#allocation3 + $0x8] sm:$0xff]
    %v68 = vld [vmem:[#allocation6] sm:$0xff]
    %v69 = vld [vmem:[#allocation6 + $0x8] sm:$0xff]
    %v70 = vsub.f32 %v66, %v68
    %v71 = vsub.f32 %v67, %v69
    %v72 = vmul.f32 %v70, %v70
    %v73 = vmul.f32 %v71, %v71
    %v74 = vld [vmem:[#allocation2] sm:$0xff]
    %v75 = vld [vmem:[#allocation2 + $0x8] sm:$0xff]
    %v76 = vadd.f32 %v72, 0.0
    %v77 = vadd.f32 %v73, 0.0
    %v78 = vadd.f32 %v74, %v76
    %v79 = vadd.f32 %v75, %v77
    %80 = vst [vmem:[#allocation2] sm:$0xff] %v78
    %81 = vst [vmem:[#allocation2 + $0x8] sm:$0xff] %v79
    // Predicated region
    $region22: #{tpu_custom_call.1} parent=1 // pred_check
      %p82 = pneg %p60
    $region23: #{tpu_custom_call.1} parent=1 // pred_check_branch
      %84 = sbr.rel (%p82) target = $region25
    $region24: #{tpu_custom_call.1} parent=1 // pred_region
      %v85 = vld [vmem:[#allocation2] sm:$0xff]
      %v86 = vld [vmem:[#allocation2 + $0x8] sm:$0xff]
      %v87 = vadd.f32 %v85, %v86
      %88 = vadd.xlane.f32.xlu0 %v87
      %v89 = vpop.xlane.xlu0 %88
      %v90 = vrot.slane %v89, 4
      %v91 = vadd.f32 %v89, %v90
      %v92 = vrot.slane %v91, 2
      %v93 = vadd.f32 %v91, %v92
      %v94 = vrot.slane %v93, 1
      %v95 = vadd.f32 %v93, %v94
      %s96 = vtos %v95
      %s97 = scalar_lea.smem [#allocation8], 0
      %98 = sst [smem:[%s97]] %s96
    $region25: #{tpu_custom_call.1} parent=1 // pred_fallthru
      _
    // Predicated region
    $region26: #{tpu_custom_call.1} parent=1 // pred_check
      _
    $region27: #{tpu_custom_call.1} parent=1 // pred_check_branch
      %100 = sbr.rel (0) target = $region29
    $region28: #{tpu_custom_call.1} parent=1 // pred_region
      %s102 = ssub.s32 16, 16
      %103 = vsyncadd [#allocation5], %s102
      %106 = dma.smem_to_hbm [#allocation8], 16, %s2, [#allocation5]
    $region29: #{tpu_custom_call.1} parent=1 // pred_fallthru
      _
    // Predicated region
    $region30: #{tpu_custom_call.1} parent=1 // pred_check
      _
    $region31: #{tpu_custom_call.1} parent=1 // pred_check_branch
      %108 = sbr.rel (0) target = $region33
    $region32: #{tpu_custom_call.1} parent=1 // pred_region
      %109 = dma.done [#allocation5], 16
    $region33: #{tpu_custom_call.1} parent=1 // pred_fallthru
      _
    %110 = sfence
    %111 = vsyncpa [#allocation4], 1
    %112 = vsyncpa [#allocation7], 1
    %113 = vsyncpa [#allocation5], 1

</llo_original>
